<compile_context>
chip_gen: v7x
topology: tpu7x:2x2x1
jax: 0.10.0
libtpu: 0.0.40
codegen_flags: <defaults>
</compile_context>

<pallas_src>
import jax
import jax.numpy as jnp
from jax.experimental import pallas as pl
from jax.experimental.pallas import tpu as pltpu


def _skip_kernel(x_ref, w_ref, b_ref, o_ref):
    # x_ref: (1, C, S, 128)    VMEM tile of one batch element's pixels
    # w_ref: (C, C)            SMEM f32 1x1-conv weight (out_ch, in_ch)
    # b_ref: (C,)              SMEM f32 bias
    # o_ref: (1, 2, C, S, 128) VMEM tile; [:,0] identity half, [:,1] submodule
    C = x_ref.shape[1]

    x = x_ref[0]                               # (C, S, 128), one load
    o_ref[0, 0] = x                            # skip (identity) half

    xf = x.astype(jnp.float32)
    for o in range(C):                         # statically unrolled, C is tiny
        acc = xf[0] * w_ref[o, 0]              # scalar (SMEM) x vector (VPU)
        for i in range(1, C):
            acc = acc + xf[i] * w_ref[o, i]
        acc = jnp.maximum(acc + b_ref[o], 0.0)
        o_ref[0, 1, o] = acc.astype(o_ref.dtype)


def _pick_sublane_tile(r: int, c: int, itemsize: int, n_batch: int,
                       budget_bytes: int = 8 << 20, min_steps: int = 16) -> int:
    """Pick S (sublane rows per tile of 128 lanes).

    Largest multiple of the sublane pack that (a) keeps in+out bytes per step
    under budget_bytes and (b) leaves >= min_steps grid steps for pipelining /
    2-TC sharding.  Full extent (S == r) is always legal if r is small.
    """
    sub = max(8, 32 // max(itemsize, 1))       # 8 f32, 16 bf16, 32 int8
    if r <= sub:
        return r                               # full-extent dim: always legal
    s_budget = max(sub, budget_bytes // (3 * c * 128 * itemsize))
    want_tiles = max(1, -(-min_steps // max(n_batch, 1)))   # ceil
    s_steps = max(sub, -(-r // want_tiles))                  # ceil(r / tiles)
    s = min(s_budget, s_steps, r)
    return max(sub, (s // sub) * sub)


def skip_connection(x_nchw: jax.Array, w: jax.Array, b: jax.Array) -> jax.Array:
    """SkipConnection forward: concat([x, relu(conv1x1(x))], axis=1).

    x_nchw: (N, C, H, W)
    w:      (C, C) pointwise-conv weight (out_ch, in_ch)
    b:      (C,)   bias
    returns (N, 2C, H, W), dtype of x.
    """
    N, C, H, W = x_nchw.shape
    HW = H * W
    itemsize = jnp.dtype(x_nchw.dtype).itemsize

    # Pad the pixel axis up to a multiple of the lane width so every tile is a
    # dense (S, 128) slab (no giant fallback block, no masked partial lanes on
    # the hot path).
    HW_pad = -(-HW // 128) * 128
    R = HW_pad // 128

    x2 = x_nchw.reshape(N, C, HW)
    if HW_pad != HW:
        x2 = jnp.pad(x2, ((0, 0), (0, 0), (0, HW_pad - HW)))
    x4 = x2.reshape(N, C, R, 128)

    # Params go to SMEM in f32 (accumulation precision regardless of x dtype).
    w32 = w.astype(jnp.float32)
    b32 = b.astype(jnp.float32)

    S = _pick_sublane_tile(R, C, itemsize, N)
    grid = (N, pl.cdiv(R, S))

    # VMEM: double-buffered in+out blocks + f32 accumulation temps + headroom,
    # clamped against the device's physical VMEM (v5e/v6e 128 MiB, v7x 64 MiB).
    block_bytes = 3 * C * S * 128 * itemsize          # in (C) + out (2C) per step
    vmem_cap = 64 << 20
    try:
        info = pltpu.get_tpu_info()
        vmem_cap = int(getattr(info, "vmem_capacity_bytes", vmem_cap))
    except Exception:
        pass
    vmem_limit = 2 * block_bytes + 2 * C * S * 128 * 4 + (2 << 20)
    vmem_limit = int(min(max(vmem_limit, 4 << 20), vmem_cap // 2))

    cost = pl.CostEstimate(
        flops=2 * N * C * C * HW,
        transcendentals=0,
        bytes_accessed=itemsize * 3 * N * C * HW + 4 * (C * C + C),
    )

    out = pl.pallas_call(
        _skip_kernel,
        out_shape=jax.ShapeDtypeStruct((N, 2, C, R, 128), x_nchw.dtype),
        grid_spec=pltpu.PrefetchScalarGridSpec(
            num_scalar_prefetch=0,
            grid=grid,
            in_specs=[
                pl.BlockSpec((1, C, S, 128), lambda n, t: (n, 0, t, 0)),
                pl.BlockSpec(memory_space=pltpu.MemorySpace.SMEM),
                pl.BlockSpec(memory_space=pltpu.MemorySpace.SMEM),
            ],
            out_specs=pl.BlockSpec((1, 2, C, S, 128),
                                   lambda n, t: (n, 0, 0, t, 0)),
        ),
        compiler_params=pltpu.CompilerParams(
            dimension_semantics=("parallel", "parallel"),
            vmem_limit_bytes=vmem_limit,
        ),
        cost_estimate=cost,
    )(x4, w32, b32)

    # (N, 2, C, R, 128) -> (N, 2, C, HW_pad): identical row-major layout.
    out = out.reshape(N, 2, C, HW_pad)
    if HW_pad != HW:
        out = out[:, :, :, :HW]
    return out.reshape(N, 2 * C, H, W)


if __name__ == "__main__":
    key = jax.random.PRNGKey(0)
    N, C, H, W = 2, 4, 16, 16

    kx, _ = jax.random.split(key)
    x = jax.random.normal(kx, (N, C, H, W), dtype=jnp.float32)

    # Deterministic parameter init for the 1x1-conv submodule.
    w = (jnp.arange(C * C, dtype=jnp.float32).reshape(C, C) / (C * C)) - 0.5
    b = jnp.arange(C, dtype=jnp.float32) * 0.1 - 0.1

    out = skip_connection(x, w, b)
    out = jax.block_until_ready(out)

    # Reference (plain JAX): concat([x, relu(conv1x1(x)+b)], axis=1)
    y_ref = jnp.einsum("oc,nchw->nohw", w, x) + b[None, :, None, None]
    y_ref = jnp.maximum(y_ref, 0.0)
    ref = jnp.concatenate([x, y_ref], axis=1)

    assert out.shape == (N, 2 * C, H, W), out.shape
    assert jnp.allclose(out, ref, atol=1e-5, rtol=1e-5), "mismatch vs reference"

    print("KERNEL_OK")
</pallas_src>

<mosaic_0001>
module attributes {stable_mosaic.version = 11 : i64} {
  func.func @_skip_kernel(%arg0: i32, %arg1: i32, %arg2: memref<1x4x2x128xf32, #tpu.memory_space<vmem>>, %arg3: memref<4x4xf32, #tpu.memory_space<smem>>, %arg4: memref<4xf32, #tpu.memory_space<smem>>, %arg5: memref<1x2x4x2x128xf32, #tpu.memory_space<vmem>>) attributes {dimension_semantics = [#tpu.dimension_semantics<parallel>, #tpu.dimension_semantics<parallel>], iteration_bounds = array<i64: 2, 1>, scalar_prefetch = 0 : i64, scratch_operands = 0 : i64, tpu.core_type = #tpu.core_type<tc>, window_params = [{transform_indices = @transform_0, window_bounds = array<i64: 1, 4, 2, 128>}, {transform_indices = @transform_1, window_bounds = array<i64: 4, 4>}, {transform_indices = @transform_2, window_bounds = array<i64: 4>}, {transform_indices = @transform_3, window_bounds = array<i64: 1, 2, 4, 2, 128>}]} {
    %c0 = arith.constant 0 : index
    %c0_0 = arith.constant 0 : index
    %c0_1 = arith.constant 0 : index
    %c0_2 = arith.constant 0 : index
    %0 = vector.load %arg2[%c0, %c0_0, %c0_1, %c0_2] : memref<1x4x2x128xf32, #tpu.memory_space<vmem>>, vector<1x4x2x128xf32>
    %1 = vector.shape_cast %0 : vector<1x4x2x128xf32> to vector<4x2x128xf32>
    %c0_3 = arith.constant 0 : index
    %c0_4 = arith.constant 0 : index
    %c0_5 = arith.constant 0 : index
    %c0_6 = arith.constant 0 : index
    %c0_7 = arith.constant 0 : index
    %2 = vector.load %arg5[%c0_3, %c0_4, %c0_5, %c0_6, %c0_7] : memref<1x2x4x2x128xf32, #tpu.memory_space<vmem>>, vector<1x1x4x2x128xf32>
    %3 = vector.shape_cast %2 : vector<1x1x4x2x128xf32> to vector<4x2x128xf32>
    %4 = vector.shape_cast %1 : vector<4x2x128xf32> to vector<1x1x4x2x128xf32>
    tpu.vector_store %arg5[%c0_3, %c0_4, %c0_5, %c0_6, %c0_7], %4 {strides = array<i32>} : memref<1x2x4x2x128xf32, #tpu.memory_space<vmem>>, vector<1x1x4x2x128xf32>,
    %5 = vector.extract_strided_slice %1 {offsets = [0, 0, 0], sizes = [1, 2, 128], strides = [1, 1, 1]} : vector<4x2x128xf32> to vector<1x2x128xf32>
    %6 = vector.shape_cast %5 : vector<1x2x128xf32> to vector<2x128xf32>
    %c0_8 = arith.constant 0 : index
    %c0_9 = arith.constant 0 : index
    %7 = memref.load %arg3[%c0_8, %c0_9] : memref<4x4xf32, #tpu.memory_space<smem>>
    %8 = vector.broadcast %7 : f32 to vector<2x128xf32>
    %9 = arith.mulf %6, %8 : vector<2x128xf32>
    %10 = vector.extract_strided_slice %1 {offsets = [1, 0, 0], sizes = [1, 2, 128], strides = [1, 1, 1]} : vector<4x2x128xf32> to vector<1x2x128xf32>
    %11 = vector.shape_cast %10 : vector<1x2x128xf32> to vector<2x128xf32>
    %c0_10 = arith.constant 0 : index
    %c1 = arith.constant 1 : index
    %12 = memref.load %arg3[%c0_10, %c1] : memref<4x4xf32, #tpu.memory_space<smem>>
    %13 = vector.broadcast %12 : f32 to vector<2x128xf32>
    %14 = arith.mulf %11, %13 : vector<2x128xf32>
    %15 = arith.addf %9, %14 : vector<2x128xf32>
    %16 = vector.extract_strided_slice %1 {offsets = [2, 0, 0], sizes = [1, 2, 128], strides = [1, 1, 1]} : vector<4x2x128xf32> to vector<1x2x128xf32>
    %17 = vector.shape_cast %16 : vector<1x2x128xf32> to vector<2x128xf32>
    %c0_11 = arith.constant 0 : index
    %c2 = arith.constant 2 : index
    %18 = memref.load %arg3[%c0_11, %c2] : memref<4x4xf32, #tpu.memory_space<smem>>
    %19 = vector.broadcast %18 : f32 to vector<2x128xf32>
    %20 = arith.mulf %17, %19 : vector<2x128xf32>
    %21 = arith.addf %15, %20 : vector<2x128xf32>
    %22 = vector.extract_strided_slice %1 {offsets = [3, 0, 0], sizes = [1, 2, 128], strides = [1, 1, 1]} : vector<4x2x128xf32> to vector<1x2x128xf32>
    %23 = vector.shape_cast %22 : vector<1x2x128xf32> to vector<2x128xf32>
    %c0_12 = arith.constant 0 : index
    %c3 = arith.constant 3 : index
    %24 = memref.load %arg3[%c0_12, %c3] : memref<4x4xf32, #tpu.memory_space<smem>>
    %25 = vector.broadcast %24 : f32 to vector<2x128xf32>
    %26 = arith.mulf %23, %25 : vector<2x128xf32>
    %27 = arith.addf %21, %26 : vector<2x128xf32>
    %c0_13 = arith.constant 0 : index
    %28 = memref.load %arg4[%c0_13] : memref<4xf32, #tpu.memory_space<smem>>
    %29 = vector.broadcast %28 : f32 to vector<2x128xf32>
    %30 = arith.addf %27, %29 : vector<2x128xf32>
    %cst = arith.constant 0.000000e+00 : f32
    %31 = vector.broadcast %cst : f32 to vector<2x128xf32>
    %32 = arith.maximumf %30, %31 : vector<2x128xf32>
    %c0_14 = arith.constant 0 : index
    %c1_15 = arith.constant 1 : index
    %c0_16 = arith.constant 0 : index
    %c0_17 = arith.constant 0 : index
    %c0_18 = arith.constant 0 : index
    %33 = vector.load %arg5[%c0_14, %c1_15, %c0_16, %c0_17, %c0_18] : memref<1x2x4x2x128xf32, #tpu.memory_space<vmem>>, vector<1x1x1x2x128xf32>
    %34 = vector.shape_cast %33 : vector<1x1x1x2x128xf32> to vector<2x128xf32>
    %35 = vector.shape_cast %32 : vector<2x128xf32> to vector<1x1x1x2x128xf32>
    tpu.vector_store %arg5[%c0_14, %c1_15, %c0_16, %c0_17, %c0_18], %35 {strides = array<i32>} : memref<1x2x4x2x128xf32, #tpu.memory_space<vmem>>, vector<1x1x1x2x128xf32>,
    %36 = vector.extract_strided_slice %1 {offsets = [0, 0, 0], sizes = [1, 2, 128], strides = [1, 1, 1]} : vector<4x2x128xf32> to vector<1x2x128xf32>
    %37 = vector.shape_cast %36 : vector<1x2x128xf32> to vector<2x128xf32>
    %c1_19 = arith.constant 1 : index
    %c0_20 = arith.constant 0 : index
    %38 = memref.load %arg3[%c1_19, %c0_20] : memref<4x4xf32, #tpu.memory_space<smem>>
    %39 = vector.broadcast %38 : f32 to vector<2x128xf32>
    %40 = arith.mulf %37, %39 : vector<2x128xf32>
    %41 = vector.extract_strided_slice %1 {offsets = [1, 0, 0], sizes = [1, 2, 128], strides = [1, 1, 1]} : vector<4x2x128xf32> to vector<1x2x128xf32>
    %42 = vector.shape_cast %41 : vector<1x2x128xf32> to vector<2x128xf32>
    %c1_21 = arith.constant 1 : index
    %c1_22 = arith.constant 1 : index
    %43 = memref.load %arg3[%c1_21, %c1_22] : memref<4x4xf32, #tpu.memory_space<smem>>
    %44 = vector.broadcast %43 : f32 to vector<2x128xf32>
    %45 = arith.mulf %42, %44 : vector<2x128xf32>
    %46 = arith.addf %40, %45 : vector<2x128xf32>
    %47 = vector.extract_strided_slice %1 {offsets = [2, 0, 0], sizes = [1, 2, 128], strides = [1, 1, 1]} : vector<4x2x128xf32> to vector<1x2x128xf32>
    %48 = vector.shape_cast %47 : vector<1x2x128xf32> to vector<2x128xf32>
    %c1_23 = arith.constant 1 : index
    %c2_24 = arith.constant 2 : index
    %49 = memref.load %arg3[%c1_23, %c2_24] : memref<4x4xf32, #tpu.memory_space<smem>>
    %50 = vector.broadcast %49 : f32 to vector<2x128xf32>
    %51 = arith.mulf %48, %50 : vector<2x128xf32>
    %52 = arith.addf %46, %51 : vector<2x128xf32>
    %53 = vector.extract_strided_slice %1 {offsets = [3, 0, 0], sizes = [1, 2, 128], strides = [1, 1, 1]} : vector<4x2x128xf32> to vector<1x2x128xf32>
    %54 = vector.shape_cast %53 : vector<1x2x128xf32> to vector<2x128xf32>
    %c1_25 = arith.constant 1 : index
    %c3_26 = arith.constant 3 : index
    %55 = memref.load %arg3[%c1_25, %c3_26] : memref<4x4xf32, #tpu.memory_space<smem>>
    %56 = vector.broadcast %55 : f32 to vector<2x128xf32>
    %57 = arith.mulf %54, %56 : vector<2x128xf32>
    %58 = arith.addf %52, %57 : vector<2x128xf32>
    %c1_27 = arith.constant 1 : index
    %59 = memref.load %arg4[%c1_27] : memref<4xf32, #tpu.memory_space<smem>>
    %60 = vector.broadcast %59 : f32 to vector<2x128xf32>
    %61 = arith.addf %58, %60 : vector<2x128xf32>
    %cst_28 = arith.constant 0.000000e+00 : f32
    %62 = vector.broadcast %cst_28 : f32 to vector<2x128xf32>
    %63 = arith.maximumf %61, %62 : vector<2x128xf32>
    %c0_29 = arith.constant 0 : index
    %c1_30 = arith.constant 1 : index
    %c1_31 = arith.constant 1 : index
    %c0_32 = arith.constant 0 : index
    %c0_33 = arith.constant 0 : index
    %64 = vector.load %arg5[%c0_29, %c1_30, %c1_31, %c0_32, %c0_33] : memref<1x2x4x2x128xf32, #tpu.memory_space<vmem>>, vector<1x1x1x2x128xf32>
    %65 = vector.shape_cast %64 : vector<1x1x1x2x128xf32> to vector<2x128xf32>
    %66 = vector.shape_cast %63 : vector<2x128xf32> to vector<1x1x1x2x128xf32>
    tpu.vector_store %arg5[%c0_29, %c1_30, %c1_31, %c0_32, %c0_33], %66 {strides = array<i32>} : memref<1x2x4x2x128xf32, #tpu.memory_space<vmem>>, vector<1x1x1x2x128xf32>,
    %67 = vector.extract_strided_slice %1 {offsets = [0, 0, 0], sizes = [1, 2, 128], strides = [1, 1, 1]} : vector<4x2x128xf32> to vector<1x2x128xf32>
    %68 = vector.shape_cast %67 : vector<1x2x128xf32> to vector<2x128xf32>
    %c2_34 = arith.constant 2 : index
    %c0_35 = arith.constant 0 : index
    %69 = memref.load %arg3[%c2_34, %c0_35] : memref<4x4xf32, #tpu.memory_space<smem>>
    %70 = vector.broadcast %69 : f32 to vector<2x128xf32>
    %71 = arith.mulf %68, %70 : vector<2x128xf32>
    %72 = vector.extract_strided_slice %1 {offsets = [1, 0, 0], sizes = [1, 2, 128], strides = [1, 1, 1]} : vector<4x2x128xf32> to vector<1x2x128xf32>
    %73 = vector.shape_cast %72 : vector<1x2x128xf32> to vector<2x128xf32>
    %c2_36 = arith.constant 2 : index
    %c1_37 = arith.constant 1 : index
    %74 = memref.load %arg3[%c2_36, %c1_37] : memref<4x4xf32, #tpu.memory_space<smem>>
    %75 = vector.broadcast %74 : f32 to vector<2x128xf32>
    %76 = arith.mulf %73, %75 : vector<2x128xf32>
    %77 = arith.addf %71, %76 : vector<2x128xf32>
    %78 = vector.extract_strided_slice %1 {offsets = [2, 0, 0], sizes = [1, 2, 128], strides = [1, 1, 1]} : vector<4x2x128xf32> to vector<1x2x128xf32>
    %79 = vector.shape_cast %78 : vector<1x2x128xf32> to vector<2x128xf32>
    %c2_38 = arith.constant 2 : index
    %c2_39 = arith.constant 2 : index
    %80 = memref.load %arg3[%c2_38, %c2_39] : memref<4x4xf32, #tpu.memory_space<smem>>
    %81 = vector.broadcast %80 : f32 to vector<2x128xf32>
    %82 = arith.mulf %79, %81 : vector<2x128xf32>
    %83 = arith.addf %77, %82 : vector<2x128xf32>
    %84 = vector.extract_strided_slice %1 {offsets = [3, 0, 0], sizes = [1, 2, 128], strides = [1, 1, 1]} : vector<4x2x128xf32> to vector<1x2x128xf32>
    %85 = vector.shape_cast %84 : vector<1x2x128xf32> to vector<2x128xf32>
    %c2_40 = arith.constant 2 : index
    %c3_41 = arith.constant 3 : index
    %86 = memref.load %arg3[%c2_40, %c3_41] : memref<4x4xf32, #tpu.memory_space<smem>>
    %87 = vector.broadcast %86 : f32 to vector<2x128xf32>
    %88 = arith.mulf %85, %87 : vector<2x128xf32>
    %89 = arith.addf %83, %88 : vector<2x128xf32>
    %c2_42 = arith.constant 2 : index
    %90 = memref.load %arg4[%c2_42] : memref<4xf32, #tpu.memory_space<smem>>
    %91 = vector.broadcast %90 : f32 to vector<2x128xf32>
    %92 = arith.addf %89, %91 : vector<2x128xf32>
    %cst_43 = arith.constant 0.000000e+00 : f32
    %93 = vector.broadcast %cst_43 : f32 to vector<2x128xf32>
    %94 = arith.maximumf %92, %93 : vector<2x128xf32>
    %c0_44 = arith.constant 0 : index
    %c1_45 = arith.constant 1 : index
    %c2_46 = arith.constant 2 : index
    %c0_47 = arith.constant 0 : index
    %c0_48 = arith.constant 0 : index
    %95 = vector.load %arg5[%c0_44, %c1_45, %c2_46, %c0_47, %c0_48] : memref<1x2x4x2x128xf32, #tpu.memory_space<vmem>>, vector<1x1x1x2x128xf32>
    %96 = vector.shape_cast %95 : vector<1x1x1x2x128xf32> to vector<2x128xf32>
    %97 = vector.shape_cast %94 : vector<2x128xf32> to vector<1x1x1x2x128xf32>
    tpu.vector_store %arg5[%c0_44, %c1_45, %c2_46, %c0_47, %c0_48], %97 {strides = array<i32>} : memref<1x2x4x2x128xf32, #tpu.memory_space<vmem>>, vector<1x1x1x2x128xf32>,
    %98 = vector.extract_strided_slice %1 {offsets = [0, 0, 0], sizes = [1, 2, 128], strides = [1, 1, 1]} : vector<4x2x128xf32> to vector<1x2x128xf32>
    %99 = vector.shape_cast %98 : vector<1x2x128xf32> to vector<2x128xf32>
    %c3_49 = arith.constant 3 : index
    %c0_50 = arith.constant 0 : index
    %100 = memref.load %arg3[%c3_49, %c0_50] : memref<4x4xf32, #tpu.memory_space<smem>>
    %101 = vector.broadcast %100 : f32 to vector<2x128xf32>
    %102 = arith.mulf %99, %101 : vector<2x128xf32>
    %103 = vector.extract_strided_slice %1 {offsets = [1, 0, 0], sizes = [1, 2, 128], strides = [1, 1, 1]} : vector<4x2x128xf32> to vector<1x2x128xf32>
    %104 = vector.shape_cast %103 : vector<1x2x128xf32> to vector<2x128xf32>
    %c3_51 = arith.constant 3 : index
    %c1_52 = arith.constant 1 : index
    %105 = memref.load %arg3[%c3_51, %c1_52] : memref<4x4xf32, #tpu.memory_space<smem>>
    %106 = vector.broadcast %105 : f32 to vector<2x128xf32>
    %107 = arith.mulf %104, %106 : vector<2x128xf32>
    %108 = arith.addf %102, %107 : vector<2x128xf32>
    %109 = vector.extract_strided_slice %1 {offsets = [2, 0, 0], sizes = [1, 2, 128], strides = [1, 1, 1]} : vector<4x2x128xf32> to vector<1x2x128xf32>
    %110 = vector.shape_cast %109 : vector<1x2x128xf32> to vector<2x128xf32>
    %c3_53 = arith.constant 3 : index
    %c2_54 = arith.constant 2 : index
    %111 = memref.load %arg3[%c3_53, %c2_54] : memref<4x4xf32, #tpu.memory_space<smem>>
    %112 = vector.broadcast %111 : f32 to vector<2x128xf32>
    %113 = arith.mulf %110, %112 : vector<2x128xf32>
    %114 = arith.addf %108, %113 : vector<2x128xf32>
    %115 = vector.extract_strided_slice %1 {offsets = [3, 0, 0], sizes = [1, 2, 128], strides = [1, 1, 1]} : vector<4x2x128xf32> to vector<1x2x128xf32>
    %116 = vector.shape_cast %115 : vector<1x2x128xf32> to vector<2x128xf32>
    %c3_55 = arith.constant 3 : index
    %c3_56 = arith.constant 3 : index
    %117 = memref.load %arg3[%c3_55, %c3_56] : memref<4x4xf32, #tpu.memory_space<smem>>
    %118 = vector.broadcast %117 : f32 to vector<2x128xf32>
    %119 = arith.mulf %116, %118 : vector<2x128xf32>
    %120 = arith.addf %114, %119 : vector<2x128xf32>
    %c3_57 = arith.constant 3 : index
    %121 = memref.load %arg4[%c3_57] : memref<4xf32, #tpu.memory_space<smem>>
    %122 = vector.broadcast %121 : f32 to vector<2x128xf32>
    %123 = arith.addf %120, %122 : vector<2x128xf32>
    %cst_58 = arith.constant 0.000000e+00 : f32
    %124 = vector.broadcast %cst_58 : f32 to vector<2x128xf32>
    %125 = arith.maximumf %123, %124 : vector<2x128xf32>
    %c0_59 = arith.constant 0 : index
    %c1_60 = arith.constant 1 : index
    %c3_61 = arith.constant 3 : index
    %c0_62 = arith.constant 0 : index
    %c0_63 = arith.constant 0 : index
    %126 = vector.load %arg5[%c0_59, %c1_60, %c3_61, %c0_62, %c0_63] : memref<1x2x4x2x128xf32, #tpu.memory_space<vmem>>, vector<1x1x1x2x128xf32>
    %127 = vector.shape_cast %126 : vector<1x1x1x2x128xf32> to vector<2x128xf32>
    %128 = vector.shape_cast %125 : vector<2x128xf32> to vector<1x1x1x2x128xf32>
    tpu.vector_store %arg5[%c0_59, %c1_60, %c3_61, %c0_62, %c0_63], %128 {strides = array<i32>} : memref<1x2x4x2x128xf32, #tpu.memory_space<vmem>>, vector<1x1x1x2x128xf32>,
    return
  }
  func.func @transform_0(%arg0: i32, %arg1: i32) -> (i32, i32, i32, i32) {
    %c0_i32 = arith.constant 0 : i32
    %c0_i32_0 = arith.constant 0 : i32
    %c0_i32_1 = arith.constant 0 : i32
    return %arg0, %c0_i32, %arg1, %c0_i32_0 : i32, i32, i32, i32
  }
  func.func @transform_1(%arg0: i32, %arg1: i32) -> (i32, i32) {
    %c0_i32 = arith.constant 0 : i32
    %c0_i32_0 = arith.constant 0 : i32
    %c0_i32_1 = arith.constant 0 : i32
    return %c0_i32, %c0_i32_0 : i32, i32
  }
  func.func @transform_2(%arg0: i32, %arg1: i32) -> i32 {
    %c0_i32 = arith.constant 0 : i32
    %c0_i32_0 = arith.constant 0 : i32
    return %c0_i32 : i32
  }
  func.func @transform_3(%arg0: i32, %arg1: i32) -> (i32, i32, i32, i32, i32) {
    %c0_i32 = arith.constant 0 : i32
    %c0_i32_0 = arith.constant 0 : i32
    %c0_i32_1 = arith.constant 0 : i32
    %c0_i32_2 = arith.constant 0 : i32
    return %arg0, %c0_i32, %c0_i32_0, %arg1, %c0_i32_1 : i32, i32, i32, i32, i32
  }
}

</mosaic_0001>

<llo_original>
// kernel: tpu_custom_call.1
$region0: #{tpu_custom_call.1}
  #allocation0 [shape = 'u32[]', space=smem, size = 0x4, offset = 0x4, fixed_abs, tag = 'smem constant byte address 0x4 - core index']
  #allocation1 [shape = 'u32[144,128]{1,0:T(1,128)}', space=vmem, size = 0x12000, scoped, tag = 'internal scratch']
  %s0 = inlined_call_operand.hbm [shape: f32[2,4,2,128], index: 0, kind: input, shape index: {}]
  %s1 = inlined_call_operand.hbm [shape: f32[4,4], index: 1, kind: input, shape index: {}]
  %s2 = inlined_call_operand.vmem [shape: f32[4], index: 2, kind: input, shape index: {}]
  %s3 = inlined_call_operand.hbm [shape: f32[2,2,4,2,128], index: 3, kind: output, shape index: {}]
  %s4 = sld [smem:[#allocation0]]
  $region57: #{tpu_custom_call.1} parent=0
    _
  %s6 = ssub.s32 1, %s4
  %s7 = scalar_select 0, %s6, %s4
  $region1: #{tpu_custom_call.1} parent=0
    #allocation2 [shape = 'u8[8192]{0}', space=vmem, size = 0x2000, scoped, tag = 'input window, operand 0']
    #allocation3 [shape = 's32[2]{0}', space=sflag, size = 0x8, scoped, tag = 'scoped memory for tpu_custom_call.1']
    #allocation4 [shape = 's32[2]{0}', space=sflag, size = 0x8, scoped, tag = 'scoped memory for tpu_custom_call.1']
    #allocation5 [shape = 's32[2]{0}', space=sflag, size = 0x8, scoped, tag = 'scoped memory for tpu_custom_call.1']
    #allocation6 [shape = 's32[2]{0}', space=sflag, size = 0x8, scoped, tag = 'scoped memory for tpu_custom_call.1']
    #allocation7 [shape = 'u8[2048]{0}', space=smem, size = 0x800, scoped, tag = 'input window, operand 1, single buffered']
    #allocation8 [shape = 'u8[512]{0}', space=smem, size = 0x200, scoped, tag = 'input window, operand 2, single buffered']
    #allocation9 [shape = 'u8[16384]{0}', space=vmem, size = 0x4000, scoped, tag = 'output window, operand 0']
    %8 = vsyncpa [#allocation3], 0
    %s9 = scalar_lea.sflag [#allocation3], 1
    %10 = vsyncpa %s9, 0
    %11 = vsyncpa [#allocation5], 0
    %12 = vsyncpa [#allocation6], 0
    %13 = vsyncpa [#allocation4], 0
    %s14 = scalar_lea.sflag [#allocation4], 1
    %15 = vsyncpa %s14, 0
    loop: start=0, step=1, limit=4
    $region2: #{tpu_custom_call.1} parent=1 // loop_pre_header
      _
    $region3: #{tpu_custom_call.1} parent=1 // loop_header
      %s17 = sphi 0, %s21
      %p18 = scmp.ge.s32.totalorder %s17, 4
      %s24 = sphi 0, %s36
      %s25 = sphi 0, %s32
      %s26 = sphi 0, %s24
      %s27 = sphi 0, %s25
      %s28 = sphi 0, %s26
      %s29 = sphi 0, %s27
      %s41 = sphi 0, %s43
      %s44 = sphi 0, %s41
      %s45 = sphi 0, %s44
      %s61 = sphi 0, %s45
      %s65 = sphi 0, %s65
      %s67 = sphi 0, %s65
      %s68 = sphi 0, %s67
      %s82 = sphi 0, %s68
      %s86 = sphi 0, %s86
      %s88 = sphi 0, %s86
      %s89 = sphi 0, %s88
      %s103 = sphi 0, %s89
      %s111 = sphi 0, %s113
      %s114 = sphi 0, %s111
      %s115 = sphi 0, %s114
      %s131 = sphi 0, %s115
    $region4: #{tpu_custom_call.1} parent=1 // loop_header_branch
      %20 = sbr.rel (%p18) target = $region8
    $region5: #{tpu_custom_call.1} parent=1 // loop_body
      %s22 = ssub.s32 %s17, 1
      %s23 = ssub.s32 %s17, 2
      %s30 = sadd.s32 1, %s25
      %p31 = scmp.ge.s32.totalorder %s30, 1
      %s32 = scalar_select %p31, 0, %s30
      %s33 = sadd.s32 1, %s24
      %s34 = scalar_select %p31, %s33, %s24
      %p35 = scmp.ge.s32.totalorder %s34, 2
      %s36 = scalar_select %p35, 0, %s34
      %s37 = ssub.s32 %s24, %s36
      %s38 = ssub.s32 %s25, %s32
      %s39 = sor.u32 %s37, %s38
      %p40 = scmp.eq.s32.totalorder %s39, 0
      %s42 = sadd.s32 %s41, 1
      %s43 = scalar_select %p40, %s41, %s42
      %p46 = pneg %p40
      %p47 = scmp.eq.s32.totalorder %s17, 1
      %p48 = por %p46, %p47
      %p49 = scmp.ne.s32.totalorder %s41, %s44
      %p50 = scmp.eq.s32.totalorder %s17, 0
      %p51 = por %p49, %p50
      %p52 = scmp.ne.s32.totalorder %s41, %s44
      %p53 = scmp.eq.s32.totalorder %s22, 1
      %p54 = por %p52, %p53
      %p55 = scmp.ne.s32.totalorder %s44, %s45
      %p56 = scmp.eq.s32.totalorder %s22, 0
      %p57 = por %p55, %p56
      %p58 = scmp.ne.s32.totalorder %s44, %s45
      %p59 = scmp.eq.s32.totalorder %s23, 1
      %p60 = por %p58, %p59
      %p62 = scmp.ne.s32.totalorder %s45, %s61
      %p63 = scmp.eq.s32.totalorder %s23, 0
      %p64 = por %p62, %p63
      %s66 = sadd.s32 %s65, 1
      %p69 = scmp.eq.s32.totalorder %s17, 1
      %p70 = scmp.ne.s32.totalorder %s65, %s67
      %p71 = scmp.eq.s32.totalorder %s17, 0
      %p72 = por %p70, %p71
      %p73 = scmp.ne.s32.totalorder %s65, %s67
      %p74 = scmp.eq.s32.totalorder %s22, 1
      %p75 = por %p73, %p74
      %p76 = scmp.ne.s32.totalorder %s67, %s68
      %p77 = scmp.eq.s32.totalorder %s22, 0
      %p78 = por %p76, %p77
      %p79 = scmp.ne.s32.totalorder %s67, %s68
      %p80 = scmp.eq.s32.totalorder %s23, 1
      %p81 = por %p79, %p80
      %p83 = scmp.ne.s32.totalorder %s68, %s82
      %p84 = scmp.eq.s32.totalorder %s23, 0
      %p85 = por %p83, %p84
      %s87 = sadd.s32 %s86, 1
      %p90 = scmp.eq.s32.totalorder %s17, 1
      %p91 = scmp.ne.s32.totalorder %s86, %s88
      %p92 = scmp.eq.s32.totalorder %s17, 0
      %p93 = por %p91, %p92
      %p94 = scmp.ne.s32.totalorder %s86, %s88
      %p95 = scmp.eq.s32.totalorder %s22, 1
      %p96 = por %p94, %p95
      %p97 = scmp.ne.s32.totalorder %s88, %s89
      %p98 = scmp.eq.s32.totalorder %s22, 0
      %p99 = por %p97, %p98
      %p100 = scmp.ne.s32.totalorder %s88, %s89
      %p101 = scmp.eq.s32.totalorder %s23, 1
      %p102 = por %p100, %p101
      %p104 = scmp.ne.s32.totalorder %s89, %s103
      %p105 = scmp.eq.s32.totalorder %s23, 0
      %p106 = por %p104, %p105
      %s107 = ssub.s32 %s24, %s36
      %s108 = ssub.s32 %s25, %s32
      %s109 = sor.u32 %s107, %s108
      %p110 = scmp.eq.s32.totalorder %s109, 0
      %s112 = sadd.s32 %s111, 1
      %s113 = scalar_select %p110, %s111, %s112
      %p116 = pneg %p110
      %p117 = scmp.eq.s32.totalorder %s17, 1
      %p118 = por %p116, %p117
      %p119 = scmp.ne.s32.totalorder %s111, %s114
      %p120 = scmp.eq.s32.totalorder %s17, 0
      %p121 = por %p119, %p120
      %p122 = scmp.ne.s32.totalorder %s111, %s114
      %p123 = scmp.eq.s32.totalorder %s22, 1
      %p124 = por %p122, %p123
      %p125 = scmp.ne.s32.totalorder %s114, %s115
      %p126 = scmp.eq.s32.totalorder %s22, 0
      %p127 = por %p125, %p126
      %p128 = scmp.ne.s32.totalorder %s114, %s115
      %p129 = scmp.eq.s32.totalorder %s23, 1
      %p130 = por %p128, %p129
      %p132 = scmp.ne.s32.totalorder %s115, %s131
      %p133 = scmp.eq.s32.totalorder %s23, 0
      %p134 = por %p132, %p133
      %p135 = scmp.le.s32.totalorder 1, %s17
      %p136 = scmp.lt.s32.totalorder %s17, 3
      %p137 = pnand %p135, %p136
      %p138 = pneg %p137
      // Predicated region
      $region9: #{tpu_custom_call.1} parent=5 // pred_check
        _
      $region10: #{tpu_custom_call.1} parent=5 // pred_check_branch
        %140 = sbr.rel (%p137) target = $region12
      $region11: #{tpu_custom_call.1} parent=5 // pred_region
        %s141 = ssub.s32 %s17, 1
        // Predicated region
        $region13: #{tpu_custom_call.1} parent=11 // pred_check
          %p142 = pneg %p78
        $region14: #{tpu_custom_call.1} parent=11 // pred_check_branch
          %144 = sbr.rel (%p142) target = $region16
        $region15: #{tpu_custom_call.1} parent=11 // pred_region
          %s146 = ssub.s32 64, 64
          %147 = vsyncadd [#allocation5], %s146
          %150 = dma.hbm_to_smem %s1, 64, [#allocation7], [#allocation5]
        $region16: #{tpu_custom_call.1} parent=11 // pred_fallthru
          _
        // Predicated region
        $region17: #{tpu_custom_call.1} parent=11 // pred_check
          %p151 = pneg %p99
        $region18: #{tpu_custom_call.1} parent=11 // pred_check_branch
          %153 = sbr.rel (%p151) target = $region20
        $region19: #{tpu_custom_call.1} parent=11 // pred_region
          %s155 = ssub.s32 16, 16
          %156 = vsyncadd [#allocation6], %s155
          %s158 = sshll.u32 %s2, 4
          %s159 = int_to_ptr.vmem [resolvable:$true] %s158
          %161 = dma.vmem_to_smem %s159, 16, [#allocation8], [#allocation6]
        $region20: #{tpu_custom_call.1} parent=11 // pred_fallthru
          _
      $region12: #{tpu_custom_call.1} parent=5 // pred_fallthru
        _
      %p162 = scmp.lt.s32.totalorder %s17, 2
      // Predicated region
      $region21: #{tpu_custom_call.1} parent=5 // pred_check
        %p163 = pneg %p162
      $region22: #{tpu_custom_call.1} parent=5 // pred_check_branch
        %165 = sbr.rel (%p163) target = $region24
      $region23: #{tpu_custom_call.1} parent=5 // pred_region
        // Predicated region
        $region25: #{tpu_custom_call.1} parent=23 // pred_check
          %p166 = pneg %p51
        $region26: #{tpu_custom_call.1} parent=23 // pred_check_branch
          %168 = sbr.rel (%p166) target = $region28
        $region27: #{tpu_custom_call.1} parent=23 // pred_region
          %s169 = sand.u32 %s41, 1
          %s170 = scalar_lea.sflag [#allocation3], %s169
          %s171 = sand.u32 %s41, 1
          %s172 = smul.addr %s171, 8
          %s173 = scalar_lea.vmem [#allocation2], %s172
          %s175 = ssub.s32 128, 128
          %176 = vsyncadd %s170, %s175
          %s177 = smul.addr %s24, 4
          %s178 = sadd.s32 %s25, %s177
          %s179 = smul.addr %s178, 32
          %s180 = scalar_lea.hbm %s0, %s179
          %s181 = sshll.u32 %s173, 4
          %s182 = int_to_ptr.vmem [resolvable:$true] %s181
          %187 = dma.hbm_to_vmem [thread:$0]  %s180, 128, %s182, %s170, 32, 32, 2
        $region28: #{tpu_custom_call.1} parent=23 // pred_fallthru
          _
      $region24: #{tpu_custom_call.1} parent=5 // pred_fallthru
        _
      %p188 = scmp.le.s32.totalorder 1, %s17
      %p189 = scmp.lt.s32.totalorder %s17, 3
      %p190 = pnand %p188, %p189
      %p191 = pneg %p190
      // Predicated region
      $region29: #{tpu_custom_call.1} parent=5 // pred_check
        _
      $region30: #{tpu_custom_call.1} parent=5 // pred_check_branch
        %193 = sbr.rel (%p190) target = $region32
      $region31: #{tpu_custom_call.1} parent=5 // pred_region
        %s194 = ssub.s32 %s17, 1
        %s195 = sand.u32 %s44, 1
        %s196 = scalar_lea.sflag [#allocation3], %s195
        %s197 = sand.u32 %s44, 1
        %s198 = smul.addr %s197, 8
        %s199 = scalar_lea.vmem [#allocation2], %s198
        // Predicated region
        $region33: #{tpu_custom_call.1} parent=31 // pred_check
          %p200 = pneg %p57
        $region34: #{tpu_custom_call.1} parent=31 // pred_check_branch
          %202 = sbr.rel (%p200) target = $region36
        $region35: #{tpu_custom_call.1} parent=31 // pred_region
          %203 = dma.done %s196, 128
        $region36: #{tpu_custom_call.1} parent=31 // pred_fallthru
          _
        // Predicated region
        $region37: #{tpu_custom_call.1} parent=31 // pred_check
          %p204 = pneg %p78
        $region38: #{tpu_custom_call.1} parent=31 // pred_check_branch
          %206 = sbr.rel (%p204) target = $region40
        $region39: #{tpu_custom_call.1} parent=31 // pred_region
          %207 = dma.done [#allocation5], 64
        $region40: #{tpu_custom_call.1} parent=31 // pred_fallthru
          _
        // Predicated region
        $region41: #{tpu_custom_call.1} parent=31 // pred_check
          %p208 = pneg %p99
        $region42: #{tpu_custom_call.1} parent=31 // pred_check_branch
          %210 = sbr.rel (%p208) target = $region44
        $region43: #{tpu_custom_call.1} parent=31 // pred_region
          %211 = dma.done [#allocation6], 16
        $region44: #{tpu_custom_call.1} parent=31 // pred_fallthru
          _
        %212 = sfence
        %s213 = sand.u32 %s44, 1
        %s214 = scalar_lea.sflag [#allocation3], %s213
        %s215 = sand.u32 %s44, 1
        %s216 = smul.addr %s215, 8
        %s217 = scalar_lea.vmem [#allocation2], %s216
        %p218 = pneg %p57
        %p219 = pneg %p54
        %p220 = pneg %p78
        %p221 = pneg %p75
        %p222 = pneg %p99
        %p223 = pneg %p96
        %p224 = pneg %p127
        %p225 = pneg %p124
        %s226 = sand.u32 %s114, 1
        %s227 = scalar_lea.sflag [#allocation4], %s226
        %s228 = sand.u32 %s114, 1
        %s229 = smul.addr %s228, 16
        %s230 = scalar_lea.vmem [#allocation9], %s229
        %v231 = vld [vmem:[%s199] sm:$0x3]
        %v232 = vld [vmem:[%s199 + $0x2] sm:$0x3]
        %v233 = vld [vmem:[%s199 + $0x4] sm:$0x3]
        %v234 = vld [vmem:[%s199 + $0x6] sm:$0x3]
        %235 = vst [vmem:[%s230] sm:$0x3] %v231
        %236 = vst [vmem:[%s230 + $0x2] sm:$0x3] %v232
        %237 = vst [vmem:[%s230 + $0x4] sm:$0x3] %v233
        %238 = vst [vmem:[%s230 + $0x6] sm:$0x3] %v234
        %s239 = sld [smem:[#allocation7]]
        %v240 = vstv %s239
        %v241 = vmul.f32 %v231, %v240
        %s242 = sld [smem:[#allocation7 + $0x1]]
        %v243 = vstv %s242
        %v244 = vmul.f32 %v232, %v243
        %v245 = vadd.f32 %v241, %v244
        %s246 = sld [smem:[#allocation7 + $0x2]]
        %v247 = vstv %s246
        %v248 = vmul.f32 %v233, %v247
        %v249 = vadd.f32 %v245, %v248
        %s250 = sld [smem:[#allocation7 + $0x3]]
        %v251 = vstv %s250
        %v252 = vmul.f32 %v234, %v251
        %v253 = vadd.f32 %v249, %v252
        %s254 = sld [smem:[#allocation8]]
        %v255 = vstv %s254
        %v256 = vadd.f32 %v253, %v255
        %v257 = vmax.f32 %v256, 0.0
        %s258 = scalar_lea.vmem %s230, 8 [#allocation9]
        %259 = vst [vmem:[%s258] sm:$0x3] %v257
        %s260 = sld [smem:[#allocation7 + $0x80]]
        %v261 = vstv %s260
        %v262 = vmul.f32 %v231, %v261
        %s263 = sld [smem:[#allocation7 + $0x81]]
        %v264 = vstv %s263
        %v265 = vmul.f32 %v232, %v264
        %v266 = vadd.f32 %v262, %v265
        %s267 = sld [smem:[#allocation7 + $0x82]]
        %v268 = vstv %s267
        %v269 = vmul.f32 %v233, %v268
        %v270 = vadd.f32 %v266, %v269
        %s271 = sld [smem:[#allocation7 + $0x83]]
        %v272 = vstv %s271
        %v273 = vmul.f32 %v234, %v272
        %v274 = vadd.f32 %v270, %v273
        %s275 = sld [smem:[#allocation8 + $0x1]]
        %v276 = vstv %s275
        %v277 = vadd.f32 %v274, %v276
        %v278 = vmax.f32 %v277, 0.0
        %s279 = scalar_lea.vmem %s230, 10 [#allocation9]
        %280 = vst [vmem:[%s279] sm:$0x3] %v278
        %s281 = sld [smem:[#allocation7 + $0x100]]
        %v282 = vstv %s281
        %v283 = vmul.f32 %v231, %v282
        %s284 = sld [smem:[#allocation7 + $0x101]]
        %v285 = vstv %s284
        %v286 = vmul.f32 %v232, %v285
        %v287 = vadd.f32 %v283, %v286
        %s288 = sld [smem:[#allocation7 + $0x102]]
        %v289 = vstv %s288
        %v290 = vmul.f32 %v233, %v289
        %v291 = vadd.f32 %v287, %v290
        %s292 = sld [smem:[#allocation7 + $0x103]]
        %v293 = vstv %s292
        %v294 = vmul.f32 %v234, %v293
        %v295 = vadd.f32 %v291, %v294
        %s296 = sld [smem:[#allocation8 + $0x2]]
        %v297 = vstv %s296
        %v298 = vadd.f32 %v295, %v297
        %v299 = vmax.f32 %v298, 0.0
        %s300 = scalar_lea.vmem %s230, 12 [#allocation9]
        %301 = vst [vmem:[%s300] sm:$0x3] %v299
        %s302 = sld [smem:[#allocation7 + $0x180]]
        %v303 = vstv %s302
        %v304 = vmul.f32 %v231, %v303
        %s305 = sld [smem:[#allocation7 + $0x181]]
        %v306 = vstv %s305
        %v307 = vmul.f32 %v232, %v306
        %v308 = vadd.f32 %v304, %v307
        %s309 = sld [smem:[#allocation7 + $0x182]]
        %v310 = vstv %s309
        %v311 = vmul.f32 %v233, %v310
        %v312 = vadd.f32 %v308, %v311
        %s313 = sld [smem:[#allocation7 + $0x183]]
        %v314 = vstv %s313
        %v315 = vmul.f32 %v234, %v314
        %v316 = vadd.f32 %v312, %v315
        %s317 = sld [smem:[#allocation8 + $0x3]]
        %v318 = vstv %s317
        %v319 = vadd.f32 %v316, %v318
        %v320 = vmax.f32 %v319, 0.0
        %s321 = scalar_lea.vmem %s230, 14 [#allocation9]
        %322 = vst [vmem:[%s321] sm:$0x3] %v320
        %s323 = sand.u32 %s114, 1
        %s324 = scalar_lea.sflag [#allocation4], %s323
        %s325 = sand.u32 %s114, 1
        %s326 = smul.addr %s325, 16
        %s327 = scalar_lea.vmem [#allocation9], %s326
        // Predicated region
        $region45: #{tpu_custom_call.1} parent=31 // pred_check
          %p328 = pneg %p124
        $region46: #{tpu_custom_call.1} parent=31 // pred_check_branch
          %330 = sbr.rel (%p328) target = $region48
        $region47: #{tpu_custom_call.1} parent=31 // pred_region
          %s332 = ssub.s32 256, 256
          %333 = vsyncadd %s324, %s332
          %s334 = smul.addr %s26, 8
          %s335 = sadd.s32 %s27, %s334
          %s336 = smul.addr %s335, 32
          %s337 = scalar_lea.hbm %s3, %s336
          %s338 = sshll.u32 %s327, 4
          %s339 = int_to_ptr.vmem [resolvable:$true] %s338
          %344 = dma.vmem_to_hbm [thread:$0]  %s339, 256, %s337, %s324, 32, 32, 2
        $region48: #{tpu_custom_call.1} parent=31 // pred_fallthru
          _
      $region32: #{tpu_custom_call.1} parent=5 // pred_fallthru
        _
      %p345 = scmp.le.s32.totalorder 2, %s17
      // Predicated region
      $region49: #{tpu_custom_call.1} parent=5 // pred_check
        %p346 = pneg %p345
      $region50: #{tpu_custom_call.1} parent=5 // pred_check_branch
        %348 = sbr.rel (%p346) target = $region52
      $region51: #{tpu_custom_call.1} parent=5 // pred_region
        %s349 = ssub.s32 %s17, 2
        // Predicated region
        $region53: #{tpu_custom_call.1} parent=51 // pred_check
          %p350 = pneg %p130
        $region54: #{tpu_custom_call.1} parent=51 // pred_check_branch
          %352 = sbr.rel (%p350) target = $region56
        $region55: #{tpu_custom_call.1} parent=51 // pred_region
          %s353 = sand.u32 %s115, 1
          %s354 = scalar_lea.sflag [#allocation4], %s353
          %s355 = sand.u32 %s115, 1
          %s356 = smul.addr %s355, 16
          %s357 = scalar_lea.vmem [#allocation9], %s356
          %358 = dma.done %s354, 256
        $region56: #{tpu_custom_call.1} parent=51 // pred_fallthru
          _
      $region52: #{tpu_custom_call.1} parent=5 // pred_fallthru
        _
    $region6: #{tpu_custom_call.1} parent=1 // loop_footer
      %s21 = sadd.s32 1, %s17
    $region7: #{tpu_custom_call.1} parent=1 // loop_footer_branch
      %16 = sbr.rel target = $region3
    $region8: #{tpu_custom_call.1} parent=1 // loop_exit
      _
    %359 = vsyncpa [#allocation3], 1
    %s360 = scalar_lea.sflag [#allocation3], 1
    %361 = vsyncpa %s360, 1
    %362 = vsyncpa [#allocation4], 1
    %s363 = scalar_lea.sflag [#allocation4], 1
    %364 = vsyncpa %s363, 1
    %365 = vsyncpa [#allocation5], 1
    %s366 = scalar_lea.sflag [#allocation5], 1
    %367 = vsyncpa %s366, 1
    %368 = vsyncpa [#allocation6], 1
    %s369 = scalar_lea.sflag [#allocation6], 1
    %370 = vsyncpa %s369, 1

</llo_original>
